<compile_context>
chip_gen: v6e
topology: v6e:2x2x1
jax: 0.10.0
libtpu: 0.0.40
codegen_flags: <defaults>
</compile_context>

<pallas_src>
import jax
import jax.numpy as jnp
import numpy as np
from jax.experimental import pallas as pl
from jax.experimental.pallas import tpu as pltpu

# ---- static config (mirrors G2Net defaults at small synthetic sizes) ----
SAMPLE_RATE = 2048
HOP_LENGTH = 32
FMIN = 10.0
BINS_PER_OCTAVE = 8
KERNEL_WIDTH = 64                       # CQT conv kernel length (fixed-width basis)
N_BINS = 16                             # F: number of CQT frequency bins
N_CHANNELS = 3                          # G2Net strain channels (H1 / L1 / V1)
BATCH = 2
SIG_LEN = KERNEL_WIDTH + HOP_LENGTH * 15        # -> exactly 16 frames
N_FRAMES = (SIG_LEN - KERNEL_WIDTH) // HOP_LENGTH + 1
HIDDEN = 32                             # synthetic backbone width
NUM_CLASSES = 1                         # G2Net emits a single logit

LANE = 128                              # TPU lane width
OUT_ROWS = 8                            # sublane-padded output rows
CF = N_CHANNELS * N_BINS                # 48   (padded to LANE inside the basis)
HF = HIDDEN * N_BINS                    # 512
ROWS = BATCH * N_FRAMES                 # 32   (frames, batch-major)

assert SIG_LEN >= (N_FRAMES - 1) * HOP_LENGTH + KERNEL_WIDTH
assert CF <= LANE and HF % LANE == 0 and LANE % NUM_CLASSES == 0


def _cqt_kernels():
    """Deterministic fixed-width CQT-style complex filterbank (hann-windowed sinusoids)."""
    f = np.arange(N_BINS, dtype=np.float64)
    freqs = FMIN * 2.0 ** (f / BINS_PER_OCTAVE)
    n = np.arange(KERNEL_WIDTH, dtype=np.float64)
    window = 0.5 - 0.5 * np.cos(2.0 * np.pi * n / (KERNEL_WIDTH - 1))       # hann
    phase = 2.0 * np.pi * freqs[:, None] * n[None, :] / SAMPLE_RATE
    wr = (window[None, :] * np.cos(phase)) / KERNEL_WIDTH
    wi = (window[None, :] * np.sin(phase)) / KERNEL_WIDTH
    return wr.astype(np.float32), wi.astype(np.float32)


# -------------------- fused CQT + backbone-head kernel --------------------
def g2net_kernel(frames_ref, wcqt_ref, wmix_ref, b1_ref, sseg_ref, whead_ref,
                 b2_ref, out_ref):
    # frames_ref : (B*T, C*K)        pre-framed waveform (im2col done in wrapper)
    # wcqt_ref   : (C*K, 2*LANE)     block-diag CQT basis: lanes [0,LANE)=re, [LANE,2L)=im
    # wmix_ref   : (LANE, H*F)       kron(W1^T, I_F) channel mix, zero rows past C*F
    # b1_ref     : (1, H*F)          per-hidden bias repeated per freq bin
    # sseg_ref   : (OUT_ROWS, B*T)   per-batch segment-sum matrix (rows >= B are zero)
    # whead_ref  : (H*F, LANE)       head with 1/(F*T) pool folded in, replicated per lane
    # b2_ref     : (NC,) in SMEM
    # out_ref    : (OUT_ROWS, LANE)  lane-dense logits block; wrapper slices [:B, :NC]

    # CQT1992v2-style extractor: one MXU matmul emits [re | im] lane halves.
    reim = jnp.dot(frames_ref[...], wcqt_ref[...],
                   preferred_element_type=jnp.float32)        # (B*T, 2*LANE)
    re = reim[:, :LANE]                                       # full-vreg lane slice
    im = reim[:, LANE:]
    spec = jnp.sqrt(re * re + im * im)                        # (B*T, LANE), lanes>=CF are 0

    # Backbone head: 1x1 channel mix -> ReLU -> global mean pool -> linear.
    h = jnp.dot(spec, wmix_ref[...],
                preferred_element_type=jnp.float32)           # (B*T, H*F) lane-dense
    h = jnp.maximum(h + b1_ref[...], 0.0)                     # ReLU

    pooled = jnp.dot(sseg_ref[...], h,
                     preferred_element_type=jnp.float32)      # (OUT_ROWS, H*F)
    logits = jnp.dot(pooled, whead_ref[...],
                     preferred_element_type=jnp.float32)      # (OUT_ROWS, LANE)
    out_ref[...] = logits + b2_ref[0]                         # unmasked full-vreg store


# ---------------------------- forward wrapper ----------------------------
def g2net_forward(waveform, params):
    """Eval-mode G2Net forward: per-channel CQT spectrogram -> backbone logits."""
    B, C, L = waveform.shape
    # im2col framing in the wrapper (plain XLA): frames[(b,t), (c,k)] = wave[b,c,t*hop+k].
    t0 = jnp.arange(N_FRAMES) * HOP_LENGTH
    kk = jnp.arange(KERNEL_WIDTH)
    frames = waveform[:, :, t0[:, None] + kk[None, :]]          # (B, C, T, K)
    frames = jnp.transpose(frames, (0, 2, 1, 3)).reshape(
        B * N_FRAMES, C * KERNEL_WIDTH)                         # (B*T, C*K)

    # TODO(synk): training-only branches (SpecAugmentation, spectrogram shuffle,
    # mixup), optional features (spectral centroid / delta / PCEN / time-freq
    # encoding) and torchvision Resize are disabled under default G2Net flags in
    # eval mode; the injected timm backbone is replaced by a synthetic
    # 1x1-conv + ReLU + GAP + linear head.
    out_pad = pl.pallas_call(
        g2net_kernel,
        out_shape=jax.ShapeDtypeStruct((OUT_ROWS, LANE), jnp.float32),
        grid=(1,),
        in_specs=[
            pl.BlockSpec(frames.shape, lambda i: (0, 0)),
            pl.BlockSpec(params["w_cqt"].shape, lambda i: (0, 0)),
            pl.BlockSpec(params["w_mix"].shape, lambda i: (0, 0)),
            pl.BlockSpec(params["b1_row"].shape, lambda i: (0, 0)),
            pl.BlockSpec(params["s_seg"].shape, lambda i: (0, 0)),
            pl.BlockSpec(params["w_head"].shape, lambda i: (0, 0)),
            pl.BlockSpec(memory_space=pltpu.MemorySpace.SMEM),   # b2 scalar
        ],
        out_specs=pl.BlockSpec((OUT_ROWS, LANE), lambda i: (0, 0)),
    )(frames, params["w_cqt"], params["w_mix"], params["b1_row"],
      params["s_seg"], params["w_head"], params["b2"])
    return out_pad[:B, :NUM_CLASSES]


# ---------------------------- params / reference ----------------------------
def init_params(key):
    wr, wi = _cqt_kernels()                                    # np (F, K) each
    k1, k2, k3, k4 = jax.random.split(key, 4)
    w1 = 0.1 * jax.random.normal(k1, (HIDDEN, N_CHANNELS), jnp.float32)
    b1 = 0.1 * jax.random.normal(k3, (HIDDEN,), jnp.float32)
    w2t = 0.1 * jax.random.normal(k2, (HIDDEN, NUM_CLASSES), jnp.float32)
    b2 = 0.1 * jax.random.normal(k4, (NUM_CLASSES,), jnp.float32)

    # ---- pack weights into the fused-kernel layouts (one-time precompute) ----
    # Block-diagonal complex basis: channel c occupies lanes [c*F,(c+1)*F) of the
    # re half [0,LANE) and of the im half [LANE,2*LANE); unused lanes are zero.
    w_cqt_np = np.zeros((N_CHANNELS * KERNEL_WIDTH, 2 * LANE), np.float32)
    for c in range(N_CHANNELS):
        rows = slice(c * KERNEL_WIDTH, (c + 1) * KERNEL_WIDTH)
        w_cqt_np[rows, c * N_BINS:(c + 1) * N_BINS] = wr.T
        w_cqt_np[rows, LANE + c * N_BINS:LANE + (c + 1) * N_BINS] = wi.T
    w_cqt = jnp.asarray(w_cqt_np)

    # Channel mix: kron(W1^T, I_F), zero-padded past C*F rows up to LANE.
    w_mix = jnp.zeros((LANE, HF), jnp.float32).at[:CF, :].set(
        jnp.kron(w1.T, jnp.eye(N_BINS, dtype=jnp.float32)))
    b1_row = jnp.repeat(b1, N_BINS)[None, :]                   # (1, H*F)

    # Per-batch segment sum, sublane-padded to OUT_ROWS rows.
    s_seg = jnp.zeros((OUT_ROWS, ROWS), jnp.float32).at[:BATCH, :].set(
        jnp.kron(jnp.eye(BATCH, dtype=jnp.float32),
                 jnp.ones((1, N_FRAMES), jnp.float32)))

    # Head with the 1/(F*T) mean pool folded in, replicated across all lanes so
    # the final matmul yields a lane-dense (OUT_ROWS, LANE) block.
    head = jnp.repeat(w2t, N_BINS, axis=0) / float(N_BINS * N_FRAMES)   # (H*F, NC)
    w_head = jnp.tile(head, (1, LANE // NUM_CLASSES))          # (H*F, LANE)

    return dict(
        # raw weights (used by the pure-JAX reference)
        wr=jnp.asarray(wr), wi=jnp.asarray(wi), w1=w1, b1=b1, w2t=w2t, b2=b2,
        # packed fused-kernel weights
        w_cqt=w_cqt, w_mix=w_mix, b1_row=b1_row, s_seg=s_seg, w_head=w_head)


def g2net_reference(waveform, params):
    """Pure-JAX reference (unfused layout) for numerical validation."""
    B, C, L = waveform.shape
    hp = jax.lax.Precision.HIGHEST
    t_idx = jnp.arange(N_FRAMES) * HOP_LENGTH
    k_idx = jnp.arange(KERNEL_WIDTH)
    frames = waveform[:, :, t_idx[:, None] + k_idx[None, :]]            # (B,C,T,K)
    re = jnp.einsum("bctk,fk->bcft", frames, params["wr"], precision=hp)
    im = jnp.einsum("bctk,fk->bcft", frames, params["wi"], precision=hp)
    spec = jnp.sqrt(re * re + im * im)                                  # (B,C,F,T)
    xf = spec.reshape(B, C, -1)                                         # (B,C,F*T)
    h = jnp.einsum("hc,bcp->bhp", params["w1"], xf, precision=hp)
    h = jnp.maximum(h + params["b1"][None, :, None], 0.0)
    pooled = h.mean(-1)                                                 # (B, H)
    return jnp.dot(pooled, params["w2t"], precision=hp) + params["b2"][None, :]


if __name__ == "__main__":
    key = jax.random.PRNGKey(0)
    pkey, xkey = jax.random.split(key)
    params = init_params(pkey)
    waveform = jax.random.normal(xkey, (BATCH, N_CHANNELS, SIG_LEN), jnp.float32)

    out = jax.jit(g2net_forward)(waveform, params)
    jax.block_until_ready(out)
    assert out.shape == (BATCH, NUM_CLASSES)
    assert bool(jnp.all(jnp.isfinite(out)))

    ref = g2net_reference(waveform, params)
    np.testing.assert_allclose(np.asarray(out), np.asarray(ref),
                               rtol=2e-3, atol=1e-5)
    print("KERNEL_OK")
</pallas_src>

<mosaic_0001>
module attributes {stable_mosaic.version = 11 : i64} {
  func.func @g2net_kernel(%arg0: i32, %arg1: memref<32x192xf32, #tpu.memory_space<vmem>>, %arg2: memref<192x256xf32, #tpu.memory_space<vmem>>, %arg3: memref<128x512xf32, #tpu.memory_space<vmem>>, %arg4: memref<1x512xf32, #tpu.memory_space<vmem>>, %arg5: memref<8x32xf32, #tpu.memory_space<vmem>>, %arg6: memref<512x128xf32, #tpu.memory_space<vmem>>, %arg7: memref<1xf32, #tpu.memory_space<smem>>, %arg8: memref<8x128xf32, #tpu.memory_space<vmem>>) attributes {dimension_semantics = [#tpu.dimension_semantics<arbitrary>], iteration_bounds = array<i64: 1>, scalar_prefetch = 0 : i64, scratch_operands = 0 : i64, tpu.core_type = #tpu.core_type<tc>, window_params = [{pipeline_mode = #tpu.pipeline_mode<synchronous>, transform_indices = @transform_0, window_bounds = array<i64: 32, 192>}, {pipeline_mode = #tpu.pipeline_mode<synchronous>, transform_indices = @transform_1, window_bounds = array<i64: 192, 256>}, {pipeline_mode = #tpu.pipeline_mode<synchronous>, transform_indices = @transform_2, window_bounds = array<i64: 128, 512>}, {pipeline_mode = #tpu.pipeline_mode<synchronous>, transform_indices = @transform_3, window_bounds = array<i64: 1, 512>}, {pipeline_mode = #tpu.pipeline_mode<synchronous>, transform_indices = @transform_4, window_bounds = array<i64: 8, 32>}, {pipeline_mode = #tpu.pipeline_mode<synchronous>, transform_indices = @transform_5, window_bounds = array<i64: 512, 128>}, {transform_indices = @transform_6, window_bounds = array<i64: 1>}, {pipeline_mode = #tpu.pipeline_mode<synchronous>, transform_indices = @transform_7, window_bounds = array<i64: 8, 128>}]} {
    %c0 = arith.constant 0 : index
    %c0_0 = arith.constant 0 : index
    %0 = vector.load %arg1[%c0, %c0_0] : memref<32x192xf32, #tpu.memory_space<vmem>>, vector<32x192xf32>
    %c0_1 = arith.constant 0 : index
    %c0_2 = arith.constant 0 : index
    %1 = vector.load %arg2[%c0_1, %c0_2] : memref<192x256xf32, #tpu.memory_space<vmem>>, vector<192x256xf32>
    %cst = arith.constant dense<0.000000e+00> : vector<32x256xf32>
    %2 = tpu.matmul %0, %1, %cst {dimension_numbers = #tpu.dot_dimension_numbers<[1], [0], [0], [1], [0, 0, 1, 1], [], []>} : vector<32x192xf32>, vector<192x256xf32>, vector<32x256xf32> -> vector<32x256xf32>
    %3 = vector.extract_strided_slice %2 {offsets = [0, 0], sizes = [32, 128], strides = [1, 1]} : vector<32x256xf32> to vector<32x128xf32>
    %4 = vector.extract_strided_slice %2 {offsets = [0, 128], sizes = [32, 128], strides = [1, 1]} : vector<32x256xf32> to vector<32x128xf32>
    %5 = arith.mulf %3, %3 : vector<32x128xf32>
    %6 = arith.mulf %4, %4 : vector<32x128xf32>
    %7 = arith.addf %5, %6 : vector<32x128xf32>
    %8 = math.sqrt %7 : vector<32x128xf32>
    %c0_3 = arith.constant 0 : index
    %c0_4 = arith.constant 0 : index
    %9 = vector.load %arg3[%c0_3, %c0_4] : memref<128x512xf32, #tpu.memory_space<vmem>>, vector<128x512xf32>
    %cst_5 = arith.constant dense<0.000000e+00> : vector<32x512xf32>
    %10 = tpu.matmul %8, %9, %cst_5 {dimension_numbers = #tpu.dot_dimension_numbers<[1], [0], [0], [1], [0, 0, 1, 1], [], []>} : vector<32x128xf32>, vector<128x512xf32>, vector<32x512xf32> -> vector<32x512xf32>
    %c0_6 = arith.constant 0 : index
    %c0_7 = arith.constant 0 : index
    %11 = vector.load %arg4[%c0_6, %c0_7] : memref<1x512xf32, #tpu.memory_space<vmem>>, vector<1x512xf32>
    %12 = vector.broadcast %11 : vector<1x512xf32> to vector<32x512xf32>
    %13 = arith.addf %10, %12 : vector<32x512xf32>
    %cst_8 = arith.constant 0.000000e+00 : f32
    %14 = vector.broadcast %cst_8 : f32 to vector<32x512xf32>
    %15 = arith.maximumf %13, %14 : vector<32x512xf32>
    %c0_9 = arith.constant 0 : index
    %c0_10 = arith.constant 0 : index
    %16 = vector.load %arg5[%c0_9, %c0_10] : memref<8x32xf32, #tpu.memory_space<vmem>>, vector<8x32xf32>
    %cst_11 = arith.constant dense<0.000000e+00> : vector<8x512xf32>
    %17 = tpu.matmul %16, %15, %cst_11 {dimension_numbers = #tpu.dot_dimension_numbers<[1], [0], [0], [1], [0, 0, 1, 1], [], []>} : vector<8x32xf32>, vector<32x512xf32>, vector<8x512xf32> -> vector<8x512xf32>
    %c0_12 = arith.constant 0 : index
    %c0_13 = arith.constant 0 : index
    %18 = vector.load %arg6[%c0_12, %c0_13] : memref<512x128xf32, #tpu.memory_space<vmem>>, vector<512x128xf32>
    %cst_14 = arith.constant dense<0.000000e+00> : vector<8x128xf32>
    %19 = tpu.matmul %17, %18, %cst_14 {dimension_numbers = #tpu.dot_dimension_numbers<[1], [0], [0], [1], [0, 0, 1, 1], [], []>} : vector<8x512xf32>, vector<512x128xf32>, vector<8x128xf32> -> vector<8x128xf32>
    %c0_15 = arith.constant 0 : index
    %20 = memref.load %arg7[%c0_15] : memref<1xf32, #tpu.memory_space<smem>>
    %21 = vector.broadcast %20 : f32 to vector<8x128xf32>
    %22 = arith.addf %19, %21 : vector<8x128xf32>
    %c0_16 = arith.constant 0 : index
    %c0_17 = arith.constant 0 : index
    %23 = vector.load %arg8[%c0_16, %c0_17] : memref<8x128xf32, #tpu.memory_space<vmem>>, vector<8x128xf32>
    tpu.vector_store %arg8[%c0_16, %c0_17], %22 {strides = array<i32>} : memref<8x128xf32, #tpu.memory_space<vmem>>, vector<8x128xf32>,
    return
  }
  func.func @transform_0(%arg0: i32) -> (i32, i32) {
    %c0_i32 = arith.constant 0 : i32
    %c0_i32_0 = arith.constant 0 : i32
    %c0_i32_1 = arith.constant 0 : i32
    return %c0_i32, %c0_i32_0 : i32, i32
  }
  func.func @transform_1(%arg0: i32) -> (i32, i32) {
    %c0_i32 = arith.constant 0 : i32
    %c0_i32_0 = arith.constant 0 : i32
    %c0_i32_1 = arith.constant 0 : i32
    return %c0_i32, %c0_i32_0 : i32, i32
  }
  func.func @transform_2(%arg0: i32) -> (i32, i32) {
    %c0_i32 = arith.constant 0 : i32
    %c0_i32_0 = arith.constant 0 : i32
    %c0_i32_1 = arith.constant 0 : i32
    return %c0_i32, %c0_i32_0 : i32, i32
  }
  func.func @transform_3(%arg0: i32) -> (i32, i32) {
    %c0_i32 = arith.constant 0 : i32
    %c0_i32_0 = arith.constant 0 : i32
    %c0_i32_1 = arith.constant 0 : i32
    return %c0_i32, %c0_i32_0 : i32, i32
  }
  func.func @transform_4(%arg0: i32) -> (i32, i32) {
    %c0_i32 = arith.constant 0 : i32
    %c0_i32_0 = arith.constant 0 : i32
    %c0_i32_1 = arith.constant 0 : i32
    return %c0_i32, %c0_i32_0 : i32, i32
  }
  func.func @transform_5(%arg0: i32) -> (i32, i32) {
    %c0_i32 = arith.constant 0 : i32
    %c0_i32_0 = arith.constant 0 : i32
    %c0_i32_1 = arith.constant 0 : i32
    return %c0_i32, %c0_i32_0 : i32, i32
  }
  func.func @transform_6(%arg0: i32) -> i32 {
    %c0_i32 = arith.constant 0 : i32
    %c0_i32_0 = arith.constant 0 : i32
    return %c0_i32 : i32
  }
  func.func @transform_7(%arg0: i32) -> (i32, i32) {
    %c0_i32 = arith.constant 0 : i32
    %c0_i32_0 = arith.constant 0 : i32
    %c0_i32_1 = arith.constant 0 : i32
    return %c0_i32, %c0_i32_0 : i32, i32
  }
}

</mosaic_0001>

<llo_original>
// kernel: g2net_forward.1
$region0: #{g2net_forward.1}
  #allocation0 [shape = 'u32[]', space=smem, size = 0x4, offset = 0x4, fixed_abs, tag = 'smem constant byte address 0x4 - core index']
  #allocation1 [shape = 'u32[144,128]{1,0:T(1,128)}', space=vmem, size = 0x12000, scoped, tag = 'internal scratch']
  #allocation2 [shape = 'f32[1]{0:T(128)S(6)}', space=smem, size = 0x200, scoped, tag = 'scoped memory for g2net_forward.1']
  %s0 = inlined_call_operand.vmem [shape: f32[32,192], index: 0, kind: input, shape index: {}]
  %s1 = inlined_call_operand.vmem [shape: f32[192,256], index: 1, kind: input, shape index: {}]
  %s2 = inlined_call_operand.vmem [shape: f32[128,512], index: 2, kind: input, shape index: {}]
  %s3 = inlined_call_operand.vmem [shape: f32[1,512], index: 3, kind: input, shape index: {}]
  %s4 = inlined_call_operand.vmem [shape: f32[8,32], index: 4, kind: input, shape index: {}]
  %s5 = inlined_call_operand.vmem [shape: f32[512,128], index: 5, kind: input, shape index: {}]
  %s6 = inlined_call_operand.<no memory space> [shape: f32[1], index: 6, kind: input, shape index: {}]
  %s7 = inlined_call_operand.vmem [shape: f32[8,128], index: 7, kind: output, shape index: {}]
  %s8 = sld [smem:[#allocation0]]
  $region38: #{g2net_forward.1} parent=0
    _
  %s10 = ssub.s32 1, %s8
  %s11 = scalar_select 0, %s10, %s8
  %12 = sst [smem:[#allocation2]] %s6
  // Predicated region
  $region2: #{g2net_forward.1} parent=0 // pred_check
    _
  $region3: #{g2net_forward.1} parent=0 // pred_check_branch
    %14 = sbr.rel (0) target = $region5
  $region4: #{g2net_forward.1} parent=0 // pred_region
    _
  $region5: #{g2net_forward.1} parent=0 // pred_fallthru
    _
  // Predicated region
  $region6: #{g2net_forward.1} parent=0 // pred_check
    _
  $region7: #{g2net_forward.1} parent=0 // pred_check_branch
    %16 = sbr.rel (0) target = $region9
  $region8: #{g2net_forward.1} parent=0 // pred_region
    _
  $region9: #{g2net_forward.1} parent=0 // pred_fallthru
    _
  // Predicated region
  $region10: #{g2net_forward.1} parent=0 // pred_check
    _
  $region11: #{g2net_forward.1} parent=0 // pred_check_branch
    %18 = sbr.rel (0) target = $region13
  $region12: #{g2net_forward.1} parent=0 // pred_region
    _
  $region13: #{g2net_forward.1} parent=0 // pred_fallthru
    _
  // Predicated region
  $region14: #{g2net_forward.1} parent=0 // pred_check
    _
  $region15: #{g2net_forward.1} parent=0 // pred_check_branch
    %20 = sbr.rel (0) target = $region17
  $region16: #{g2net_forward.1} parent=0 // pred_region
    _
  $region17: #{g2net_forward.1} parent=0 // pred_fallthru
    _
  // Predicated region
  $region18: #{g2net_forward.1} parent=0 // pred_check
    _
  $region19: #{g2net_forward.1} parent=0 // pred_check_branch
    %22 = sbr.rel (0) target = $region21
  $region20: #{g2net_forward.1} parent=0 // pred_region
    _
  $region21: #{g2net_forward.1} parent=0 // pred_fallthru
    _
  // Predicated region
  $region22: #{g2net_forward.1} parent=0 // pred_check
    _
  $region23: #{g2net_forward.1} parent=0 // pred_check_branch
    %24 = sbr.rel (0) target = $region25
  $region24: #{g2net_forward.1} parent=0 // pred_region
    _
  $region25: #{g2net_forward.1} parent=0 // pred_fallthru
    _
  // Predicated region
  $region26: #{g2net_forward.1} parent=0 // pred_check
    _
  $region27: #{g2net_forward.1} parent=0 // pred_check_branch
    %26 = sbr.rel (0) target = $region29
  $region28: #{g2net_forward.1} parent=0 // pred_region
    _
  $region29: #{g2net_forward.1} parent=0 // pred_fallthru
    _
  %v27 = vld [vmem:[%s0] sm:$0xff]
  %v28 = vld [vmem:[%s0 + $0x8] sm:$0xff]
  %v29 = vld [vmem:[%s0 + $0x10] sm:$0xff]
  %v30 = vld [vmem:[%s0 + $0x18] sm:$0xff]
  %v31 = vld [vmem:[%s0 + $0x20] sm:$0xff]
  %v32 = vld [vmem:[%s0 + $0x28] sm:$0xff]
  %v33 = vld [vmem:[%s0 + $0x30] sm:$0xff]
  %v34 = vld [vmem:[%s0 + $0x38] sm:$0xff]
  %v35 = vld [vmem:[%s1] sm:$0xff]
  %v36 = vld [vmem:[%s1 + $0x8] sm:$0xff]
  %v37 = vld [vmem:[%s1 + $0x10] sm:$0xff]
  %v38 = vld [vmem:[%s1 + $0x18] sm:$0xff]
  %v39 = vld [vmem:[%s1 + $0x20] sm:$0xff]
  %v40 = vld [vmem:[%s1 + $0x28] sm:$0xff]
  %v41 = vld [vmem:[%s1 + $0x30] sm:$0xff]
  %v42 = vld [vmem:[%s1 + $0x38] sm:$0xff]
  %v43 = vld [vmem:[%s1 + $0x40] sm:$0xff]
  %v44 = vld [vmem:[%s1 + $0x48] sm:$0xff]
  %v45 = vld [vmem:[%s1 + $0x50] sm:$0xff]
  %v46 = vld [vmem:[%s1 + $0x58] sm:$0xff]
  %v47 = vld [vmem:[%s1 + $0x60] sm:$0xff]
  %v48 = vld [vmem:[%s1 + $0x68] sm:$0xff]
  %v49 = vld [vmem:[%s1 + $0x70] sm:$0xff]
  %v50 = vld [vmem:[%s1 + $0x78] sm:$0xff]
  %v51 = vld [vmem:[%s1 + $0x80] sm:$0xff]
  %v52 = vld [vmem:[%s1 + $0x88] sm:$0xff]
  %v53 = vld [vmem:[%s1 + $0x90] sm:$0xff]
  %v54 = vld [vmem:[%s1 + $0x98] sm:$0xff]
  %v55 = vld [vmem:[%s1 + $0xa0] sm:$0xff]
  %v56 = vld [vmem:[%s1 + $0xa8] sm:$0xff]
  %v57 = vld [vmem:[%s1 + $0xb0] sm:$0xff]
  %v58 = vld [vmem:[%s1 + $0xb8] sm:$0xff]
  %v59 = vld [vmem:[%s1 + $0xc0] sm:$0xff]
  %v60 = vld [vmem:[%s1 + $0xc8] sm:$0xff]
  %v61 = vld [vmem:[%s1 + $0xd0] sm:$0xff]
  %v62 = vld [vmem:[%s1 + $0xd8] sm:$0xff]
  %v63 = vld [vmem:[%s1 + $0xe0] sm:$0xff]
  %v64 = vld [vmem:[%s1 + $0xe8] sm:$0xff]
  %v65 = vld [vmem:[%s1 + $0xf0] sm:$0xff]
  %v66 = vld [vmem:[%s1 + $0xf8] sm:$0xff]
  %v67 = vld [vmem:[%s1 + $0x100] sm:$0xff]
  %v68 = vld [vmem:[%s1 + $0x108] sm:$0xff]
  %v69 = vld [vmem:[%s1 + $0x110] sm:$0xff]
  %v70 = vld [vmem:[%s1 + $0x118] sm:$0xff]
  %v71 = vld [vmem:[%s1 + $0x120] sm:$0xff]
  %v72 = vld [vmem:[%s1 + $0x128] sm:$0xff]
  %v73 = vld [vmem:[%s1 + $0x130] sm:$0xff]
  %v74 = vld [vmem:[%s1 + $0x138] sm:$0xff]
  %v75 = vld [vmem:[%s1 + $0x140] sm:$0xff]
  %v76 = vld [vmem:[%s1 + $0x148] sm:$0xff]
  %v77 = vld [vmem:[%s1 + $0x150] sm:$0xff]
  %v78 = vld [vmem:[%s1 + $0x158] sm:$0xff]
  %v79 = vld [vmem:[%s1 + $0x160] sm:$0xff]
  %v80 = vld [vmem:[%s1 + $0x168] sm:$0xff]
  %v81 = vld [vmem:[%s1 + $0x170] sm:$0xff]
  %v82 = vld [vmem:[%s1 + $0x178] sm:$0xff]
  %vm83 = vcmask 523264
  %v85 = vsel %vm83, %v28, 0
  %v88 = vsel %vm83, %v30, 0
  %v91 = vsel %vm83, %v32, 0
  %v94 = vsel %vm83, %v34, 0
  %96 = vmatprep.subr.mxu0 %v66
  %97 = vmatpush1.msra.mxu0 %v65
  %98 = vmatprep.subr.mxu0 %v64
  %99 = vmatpush1.msra.mxu0 %v63
  %100 = vmatprep.subr.mxu0 %v62
  %101 = vmatpush1.msra.mxu0 %v61
  %102 = vmatprep.subr.mxu0 %v60
  %103 = vmatpush1.msra.mxu0 %v59
  %104 = vmatprep.subr.mxu0 %v58
  %105 = vmatpush1.msra.mxu0 %v57
  %106 = vmatprep.subr.mxu0 %v56
  %107 = vmatpush1.msra.mxu0 %v55
  %108 = vmatprep.subr.mxu0 %v54
  %109 = vmatpush1.msra.mxu0 %v53
  %110 = vmatprep.subr.mxu0 %v52
  %111 = vmatpush1.msra.mxu0 %v51
  %112 = vmatprep.subr.mxu0 %v50
  %113 = vmatpush1.msra.mxu0 %v49
  %114 = vmatprep.subr.mxu0 %v48
  %115 = vmatpush1.msra.mxu0 %v47
  %116 = vmatprep.subr.mxu0 %v46
  %117 = vmatpush1.msra.mxu0 %v45
  %118 = vmatprep.subr.mxu0 %v44
  %119 = vmatpush1.msra.mxu0 %v43
  %120 = vmatprep.subr.mxu0 %v42
  %121 = vmatpush1.msra.mxu0 %v41
  %122 = vmatprep.subr.mxu0 %v40
  %123 = vmatpush1.msra.mxu0 %v39
  %124 = vmatprep.subr.mxu0 %v38
  %125 = vmatpush1.msra.mxu0 %v37
  %126 = vmatprep.subr.mxu0 %v36
  %127 = vmatpush1.msra.mxu0 %v35
  %128 = vmatprep.subr.mxu0 0.0
  %129 = vmatpush2.msra.mxu0 0.0
  %130 = vmatprep.subr.mxu0 0.0
  %131 = vmatpush2.msra.mxu0 0.0
  %132 = vmatprep.subr.mxu0 0.0
  %133 = vmatpush2.msra.mxu0 0.0
  %134 = vmatprep.subr.mxu0 0.0
  %135 = vmatpush2.msra.mxu0 0.0
  %136 = vmatprep.subr.mxu0 0.0
  %137 = vmatpush2.msra.mxu0 0.0
  %138 = vmatprep.subr.mxu0 0.0
  %139 = vmatpush2.msra.mxu0 0.0
  %140 = vmatprep.subr.mxu0 0.0
  %141 = vmatpush2.msra.mxu0 0.0
  %142 = vmatprep.subr.mxu0 0.0
  %143 = vmatpush2.msra.mxu0 0.0
  %144 = vmatprep.subr.mxu0 %v82
  %145 = vmatpush2.msra.mxu0 %v81
  %146 = vmatprep.subr.mxu0 %v80
  %147 = vmatpush2.msra.mxu0 %v79
  %148 = vmatprep.subr.mxu0 %v78
  %149 = vmatpush2.msra.mxu0 %v77
  %150 = vmatprep.subr.mxu0 %v76
  %151 = vmatpush2.msra.mxu0 %v75
  %152 = vmatprep.subr.mxu0 %v74
  %153 = vmatpush2.msra.mxu0 %v73
  %154 = vmatprep.subr.mxu0 %v72
  %155 = vmatpush2.msra.mxu0 %v71
  %156 = vmatprep.subr.mxu0 %v70
  %157 = vmatpush2.msra.mxu0 %v69
  %158 = vmatprep.subr.mxu0 %v68
  %159 = vmatpush2.msra.mxu0 %v67
  %160 = vmatprep.mubr.f32.mxu0 %v85
  %161 = vmatmul.mubr.f32.gmra.mxu0 %v27
  %v162 = vpop.f32.mrf.mxu0
  %v163 = vadd.f32 0.0, %v162
  %v164 = vpop.f32.mrf.mxu0
  %v165 = vadd.f32 0.0, %v164
  %166 = vmatprep.mubr.f32.mxu0 %v88
  %167 = vmatmul.mubr.f32.gmra.mxu0 %v29
  %v168 = vpop.f32.mrf.mxu0
  %v169 = vadd.f32 0.0, %v168
  %v170 = vpop.f32.mrf.mxu0
  %v171 = vadd.f32 0.0, %v170
  %172 = vmatprep.mubr.f32.mxu0 %v91
  %173 = vmatmul.mubr.f32.gmra.mxu0 %v31
  %v174 = vpop.f32.mrf.mxu0
  %v175 = vadd.f32 0.0, %v174
  %v176 = vpop.f32.mrf.mxu0
  %v177 = vadd.f32 0.0, %v176
  %178 = vmatprep.mubr.f32.mxu0 %v94
  %179 = vmatmul.mubr.f32.gmra.mxu0 %v33
  %v180 = vpop.f32.mrf.mxu0
  %v181 = vadd.f32 0.0, %v180
  %v182 = vpop.f32.mrf.mxu0
  %v183 = vadd.f32 0.0, %v182
  %184 = vdwg.mxu0
  %v185 = vmul.f32 %v163, %v163
  %v186 = vmul.f32 %v169, %v169
  %v187 = vmul.f32 %v175, %v175
  %v188 = vmul.f32 %v181, %v181
  %v189 = vmul.f32 %v165, %v165
  %v190 = vmul.f32 %v171, %v171
  %v191 = vmul.f32 %v177, %v177
  %v192 = vmul.f32 %v183, %v183
  %v193 = vadd.f32 %v185, %v189
  %v194 = vadd.f32 %v186, %v190
  %v195 = vadd.f32 %v187, %v191
  %v196 = vadd.f32 %v188, %v192
  %v197 = vrsqrt.pop %v193
  %v198 = vmul.f32 %v193, %v197
  %vm199 = vcmp.eq.f32.partialorder %v193, inf
  %v200 = vsel %vm199, %v193, %v198
  %vm201 = vcmp.eq.f32.partialorder %v193, 0.0
  %v202 = vand.u32 %v193, 2147483648
  %v203 = vsel %vm201, %v202, %v200
  %v204 = vrsqrt.pop %v194
  %v205 = vmul.f32 %v194, %v204
  %vm206 = vcmp.eq.f32.partialorder %v194, inf
  %v207 = vsel %vm206, %v194, %v205
  %vm208 = vcmp.eq.f32.partialorder %v194, 0.0
  %v209 = vand.u32 %v194, 2147483648
  %v210 = vsel %vm208, %v209, %v207
  %v211 = vrsqrt.pop %v195
  %v212 = vmul.f32 %v195, %v211
  %vm213 = vcmp.eq.f32.partialorder %v195, inf
  %v214 = vsel %vm213, %v195, %v212
  %vm215 = vcmp.eq.f32.partialorder %v195, 0.0
  %v216 = vand.u32 %v195, 2147483648
  %v217 = vsel %vm215, %v216, %v214
  %v218 = vrsqrt.pop %v196
  %v219 = vmul.f32 %v196, %v218
  %vm220 = vcmp.eq.f32.partialorder %v196, inf
  %v221 = vsel %vm220, %v196, %v219
  %vm222 = vcmp.eq.f32.partialorder %v196, 0.0
  %v223 = vand.u32 %v196, 2147483648
  %v224 = vsel %vm222, %v223, %v221
  %v225 = vld [vmem:[%s2] sm:$0xff]
  %v226 = vld [vmem:[%s2 + $0x8] sm:$0xff]
  %v227 = vld [vmem:[%s2 + $0x10] sm:$0xff]
  %v228 = vld [vmem:[%s2 + $0x18] sm:$0xff]
  %v229 = vld [vmem:[%s2 + $0x20] sm:$0xff]
  %v230 = vld [vmem:[%s2 + $0x28] sm:$0xff]
  %v231 = vld [vmem:[%s2 + $0x30] sm:$0xff]
  %v232 = vld [vmem:[%s2 + $0x38] sm:$0xff]
  %v233 = vld [vmem:[%s2 + $0x40] sm:$0xff]
  %v234 = vld [vmem:[%s2 + $0x48] sm:$0xff]
  %v235 = vld [vmem:[%s2 + $0x50] sm:$0xff]
  %v236 = vld [vmem:[%s2 + $0x58] sm:$0xff]
  %v237 = vld [vmem:[%s2 + $0x60] sm:$0xff]
  %v238 = vld [vmem:[%s2 + $0x68] sm:$0xff]
  %v239 = vld [vmem:[%s2 + $0x70] sm:$0xff]
  %v240 = vld [vmem:[%s2 + $0x78] sm:$0xff]
  %v241 = vld [vmem:[%s2 + $0x80] sm:$0xff]
  %v242 = vld [vmem:[%s2 + $0x88] sm:$0xff]
  %v243 = vld [vmem:[%s2 + $0x90] sm:$0xff]
  %v244 = vld [vmem:[%s2 + $0x98] sm:$0xff]
  %v245 = vld [vmem:[%s2 + $0xa0] sm:$0xff]
  %v246 = vld [vmem:[%s2 + $0xa8] sm:$0xff]
  %v247 = vld [vmem:[%s2 + $0xb0] sm:$0xff]
  %v248 = vld [vmem:[%s2 + $0xb8] sm:$0xff]
  %v249 = vld [vmem:[%s2 + $0xc0] sm:$0xff]
  %v250 = vld [vmem:[%s2 + $0xc8] sm:$0xff]
  %v251 = vld [vmem:[%s2 + $0xd0] sm:$0xff]
  %v252 = vld [vmem:[%s2 + $0xd8] sm:$0xff]
  %v253 = vld [vmem:[%s2 + $0xe0] sm:$0xff]
  %v254 = vld [vmem:[%s2 + $0xe8] sm:$0xff]
  %v255 = vld [vmem:[%s2 + $0xf0] sm:$0xff]
  %v256 = vld [vmem:[%s2 + $0xf8] sm:$0xff]
  %v257 = vld [vmem:[%s2 + $0x100] sm:$0xff]
  %v258 = vld [vmem:[%s2 + $0x108] sm:$0xff]
  %v259 = vld [vmem:[%s2 + $0x110] sm:$0xff]
  %v260 = vld [vmem:[%s2 + $0x118] sm:$0xff]
  %v261 = vld [vmem:[%s2 + $0x120] sm:$0xff]
  %v262 = vld [vmem:[%s2 + $0x128] sm:$0xff]
  %v263 = vld [vmem:[%s2 + $0x130] sm:$0xff]
  %v264 = vld [vmem:[%s2 + $0x138] sm:$0xff]
  %v265 = vld [vmem:[%s2 + $0x140] sm:$0xff]
  %v266 = vld [vmem:[%s2 + $0x148] sm:$0xff]
  %v267 = vld [vmem:[%s2 + $0x150] sm:$0xff]
  %v268 = vld [vmem:[%s2 + $0x158] sm:$0xff]
  %v269 = vld [vmem:[%s2 + $0x160] sm:$0xff]
  %v270 = vld [vmem:[%s2 + $0x168] sm:$0xff]
  %v271 = vld [vmem:[%s2 + $0x170] sm:$0xff]
  %v272 = vld [vmem:[%s2 + $0x178] sm:$0xff]
  %v273 = vld [vmem:[%s2 + $0x180] sm:$0xff]
  %v274 = vld [vmem:[%s2 + $0x188] sm:$0xff]
  %v275 = vld [vmem:[%s2 + $0x190] sm:$0xff]
  %v276 = vld [vmem:[%s2 + $0x198] sm:$0xff]
  %v277 = vld [vmem:[%s2 + $0x1a0] sm:$0xff]
  %v278 = vld [vmem:[%s2 + $0x1a8] sm:$0xff]
  %v279 = vld [vmem:[%s2 + $0x1b0] sm:$0xff]
  %v280 = vld [vmem:[%s2 + $0x1b8] sm:$0xff]
  %v281 = vld [vmem:[%s2 + $0x1c0] sm:$0xff]
  %v282 = vld [vmem:[%s2 + $0x1c8] sm:$0xff]
  %v283 = vld [vmem:[%s2 + $0x1d0] sm:$0xff]
  %v284 = vld [vmem:[%s2 + $0x1d8] sm:$0xff]
  %v285 = vld [vmem:[%s2 + $0x1e0] sm:$0xff]
  %v286 = vld [vmem:[%s2 + $0x1e8] sm:$0xff]
  %v287 = vld [vmem:[%s2 + $0x1f0] sm:$0xff]
  %v288 = vld [vmem:[%s2 + $0x1f8] sm:$0xff]
  %v289 = vld [vmem:[%s3] sm:$0xf]
  %v291 = vlaneseq
  %v292 = vshrl.u32 %v291, 7
  %v293 = vsub.s32 0, %v292
  %v294 = vrot.slane %v289, %v293
  %v295 = vlaneseq
  %v296 = vshrl.u32 %v295, 7
  %v297 = vsub.s32 1, %v296
  %v298 = vrot.slane %v289, %v297
  %v299 = vlaneseq
  %v300 = vshrl.u32 %v299, 7
  %v301 = vsub.s32 2, %v300
  %v302 = vrot.slane %v289, %v301
  %v303 = vlaneseq
  %v304 = vshrl.u32 %v303, 7
  %v305 = vsub.s32 3, %v304
  %v306 = vrot.slane %v289, %v305
  %311 = vmatprep.subr.mxu0 %v286
  %312 = vmatpush1.msra.mxu0 %v285
  %313 = vmatprep.subr.mxu0 %v282
  %314 = vmatpush1.msra.mxu0 %v281
  %315 = vmatprep.subr.mxu0 %v278
  %316 = vmatpush1.msra.mxu0 %v277
  %317 = vmatprep.subr.mxu0 %v274
  %318 = vmatpush1.msra.mxu0 %v273
  %319 = vmatprep.subr.mxu0 %v270
  %320 = vmatpush1.msra.mxu0 %v269
  %321 = vmatprep.subr.mxu0 %v266
  %322 = vmatpush1.msra.mxu0 %v265
  %323 = vmatprep.subr.mxu0 %v262
  %324 = vmatpush1.msra.mxu0 %v261
  %325 = vmatprep.subr.mxu0 %v258
  %326 = vmatpush1.msra.mxu0 %v257
  %327 = vmatprep.subr.mxu0 %v254
  %328 = vmatpush1.msra.mxu0 %v253
  %329 = vmatprep.subr.mxu0 %v250
  %330 = vmatpush1.msra.mxu0 %v249
  %331 = vmatprep.subr.mxu0 %v246
  %332 = vmatpush1.msra.mxu0 %v245
  %333 = vmatprep.subr.mxu0 %v242
  %334 = vmatpush1.msra.mxu0 %v241
  %335 = vmatprep.subr.mxu0 %v238
  %336 = vmatpush1.msra.mxu0 %v237
  %337 = vmatprep.subr.mxu0 %v234
  %338 = vmatpush1.msra.mxu0 %v233
  %339 = vmatprep.subr.mxu0 %v230
  %340 = vmatpush1.msra.mxu0 %v229
  %341 = vmatprep.subr.mxu0 %v226
  %342 = vmatpush1.msra.mxu0 %v225
  %343 = vmatprep.subr.mxu0 0.0
  %344 = vmatpush2.msra.mxu0 0.0
  %345 = vmatprep.subr.mxu0 0.0
  %346 = vmatpush2.msra.mxu0 0.0
  %347 = vmatprep.subr.mxu0 0.0
  %348 = vmatpush2.msra.mxu0 0.0
  %349 = vmatprep.subr.mxu0 0.0
  %350 = vmatpush2.msra.mxu0 0.0
  %351 = vmatprep.subr.mxu0 0.0
  %352 = vmatpush2.msra.mxu0 0.0
  %353 = vmatprep.subr.mxu0 0.0
  %354 = vmatpush2.msra.mxu0 0.0
  %355 = vmatprep.subr.mxu0 0.0
  %356 = vmatpush2.msra.mxu0 0.0
  %357 = vmatprep.subr.mxu0 0.0
  %358 = vmatpush2.msra.mxu0 0.0
  %359 = vmatprep.subr.mxu0 0.0
  %360 = vmatpush2.msra.mxu0 0.0
  %361 = vmatprep.subr.mxu0 0.0
  %362 = vmatpush2.msra.mxu0 0.0
  %363 = vmatprep.subr.mxu0 0.0
  %364 = vmatpush2.msra.mxu0 0.0
  %365 = vmatprep.subr.mxu0 0.0
  %366 = vmatpush2.msra.mxu0 0.0
  %367 = vmatprep.subr.mxu0 0.0
  %368 = vmatpush2.msra.mxu0 0.0
  %369 = vmatprep.subr.mxu0 0.0
  %370 = vmatpush2.msra.mxu0 0.0
  %371 = vmatprep.subr.mxu0 0.0
  %372 = vmatpush2.msra.mxu0 0.0
  %373 = vmatprep.subr.mxu0 0.0
  %374 = vmatpush2.msra.mxu0 0.0
  %375 = vmatprep.mubr.f32.mxu0 0.0
  %376 = vmatmul.mubr.f32.gmra.mxu0 %v203
  %v377 = vpop.f32.mrf.mxu0
  %v378 = vadd.f32 %v294, %v377
  %v379 = vpop.f32.mrf.mxu0
  %v380 = vadd.f32 %v298, %v379
  %381 = vmatprep.mubr.f32.mxu0 0.0
  %382 = vmatmul.mubr.f32.gmra.mxu0 %v210
  %v383 = vpop.f32.mrf.mxu0
  %v384 = vadd.f32 %v294, %v383
  %v385 = vpop.f32.mrf.mxu0
  %v386 = vadd.f32 %v298, %v385
  %387 = vmatprep.mubr.f32.mxu0 0.0
  %388 = vmatmul.mubr.f32.gmra.mxu0 %v217
  %v389 = vpop.f32.mrf.mxu0
  %v390 = vadd.f32 %v294, %v389
  %v391 = vpop.f32.mrf.mxu0
  %v392 = vadd.f32 %v298, %v391
  %393 = vmatprep.mubr.f32.mxu0 0.0
  %394 = vmatmul.mubr.f32.gmra.mxu0 %v224
  %v395 = vpop.f32.mrf.mxu0
  %v396 = vadd.f32 %v294, %v395
  %v397 = vpop.f32.mrf.mxu0
  %v398 = vadd.f32 %v298, %v397
  %399 = vdwg.mxu0
  %400 = vmatprep.subr.mxu0 %v288
  %401 = vmatpush1.msra.mxu0 %v287
  %402 = vmatprep.subr.mxu0 %v284
  %403 = vmatpush1.msra.mxu0 %v283
  %404 = vmatprep.subr.mxu0 %v280
  %405 = vmatpush1.msra.mxu0 %v279
  %406 = vmatprep.subr.mxu0 %v276
  %407 = vmatpush1.msra.mxu0 %v275
  %408 = vmatprep.subr.mxu0 %v272
  %409 = vmatpush1.msra.mxu0 %v271
  %410 = vmatprep.subr.mxu0 %v268
  %411 = vmatpush1.msra.mxu0 %v267
  %412 = vmatprep.subr.mxu0 %v264
  %413 = vmatpush1.msra.mxu0 %v263
  %414 = vmatprep.subr.mxu0 %v260
  %415 = vmatpush1.msra.mxu0 %v259
  %416 = vmatprep.subr.mxu0 %v256
  %417 = vmatpush1.msra.mxu0 %v255
  %418 = vmatprep.subr.mxu0 %v252
  %419 = vmatpush1.msra.mxu0 %v251
  %420 = vmatprep.subr.mxu0 %v248
  %421 = vmatpush1.msra.mxu0 %v247
  %422 = vmatprep.subr.mxu0 %v244
  %423 = vmatpush1.msra.mxu0 %v243
  %424 = vmatprep.subr.mxu0 %v240
  %425 = vmatpush1.msra.mxu0 %v239
  %426 = vmatprep.subr.mxu0 %v236
  %427 = vmatpush1.msra.mxu0 %v235
  %428 = vmatprep.subr.mxu0 %v232
  %429 = vmatpush1.msra.mxu0 %v231
  %430 = vmatprep.subr.mxu0 %v228
  %431 = vmatpush1.msra.mxu0 %v227
  %432 = vmatprep.subr.mxu0 0.0
  %433 = vmatpush2.msra.mxu0 0.0
  %434 = vmatprep.subr.mxu0 0.0
  %435 = vmatpush2.msra.mxu0 0.0
  %436 = vmatprep.subr.mxu0 0.0
  %437 = vmatpush2.msra.mxu0 0.0
  %438 = vmatprep.subr.mxu0 0.0
  %439 = vmatpush2.msra.mxu0 0.0
  %440 = vmatprep.subr.mxu0 0.0
  %441 = vmatpush2.msra.mxu0 0.0
  %442 = vmatprep.subr.mxu0 0.0
  %443 = vmatpush2.msra.mxu0 0.0
  %444 = vmatprep.subr.mxu0 0.0
  %445 = vmatpush2.msra.mxu0 0.0
  %446 = vmatprep.subr.mxu0 0.0
  %447 = vmatpush2.msra.mxu0 0.0
  %448 = vmatprep.subr.mxu0 0.0
  %449 = vmatpush2.msra.mxu0 0.0
  %450 = vmatprep.subr.mxu0 0.0
  %451 = vmatpush2.msra.mxu0 0.0
  %452 = vmatprep.subr.mxu0 0.0
  %453 = vmatpush2.msra.mxu0 0.0
  %454 = vmatprep.subr.mxu0 0.0
  %455 = vmatpush2.msra.mxu0 0.0
  %456 = vmatprep.subr.mxu0 0.0
  %457 = vmatpush2.msra.mxu0 0.0
  %458 = vmatprep.subr.mxu0 0.0
  %459 = vmatpush2.msra.mxu0 0.0
  %460 = vmatprep.subr.mxu0 0.0
  %461 = vmatpush2.msra.mxu0 0.0
  %462 = vmatprep.subr.mxu0 0.0
  %463 = vmatpush2.msra.mxu0 0.0
  %464 = vmatprep.mubr.f32.mxu0 0.0
  %465 = vmatmul.mubr.f32.gmra.mxu0 %v203
  %v466 = vpop.f32.mrf.mxu0
  %v467 = vadd.f32 %v302, %v466
  %v468 = vpop.f32.mrf.mxu0
  %v469 = vadd.f32 %v306, %v468
  %470 = vmatprep.mubr.f32.mxu0 0.0
  %471 = vmatmul.mubr.f32.gmra.mxu0 %v210
  %v472 = vpop.f32.mrf.mxu0
  %v473 = vadd.f32 %v302, %v472
  %v474 = vpop.f32.mrf.mxu0
  %v475 = vadd.f32 %v306, %v474
  %476 = vmatprep.mubr.f32.mxu0 0.0
  %477 = vmatmul.mubr.f32.gmra.mxu0 %v217
  %v478 = vpop.f32.mrf.mxu0
  %v479 = vadd.f32 %v302, %v478
  %v480 = vpop.f32.mrf.mxu0
  %v481 = vadd.f32 %v306, %v480
  %482 = vmatprep.mubr.f32.mxu0 0.0
  %483 = vmatmul.mubr.f32.gmra.mxu0 %v224
  %v484 = vpop.f32.mrf.mxu0
  %v485 = vadd.f32 %v302, %v484
  %v486 = vpop.f32.mrf.mxu0
  %v487 = vadd.f32 %v306, %v486
  %488 = vdwg.mxu0
  %v489 = vmax.f32 %v378, 0.0
  %v490 = vmax.f32 %v380, 0.0
  %v491 = vmax.f32 %v467, 0.0
  %v492 = vmax.f32 %v469, 0.0
  %v493 = vmax.f32 %v384, 0.0
  %v494 = vmax.f32 %v386, 0.0
  %v495 = vmax.f32 %v473, 0.0
  %v496 = vmax.f32 %v475, 0.0
  %v497 = vmax.f32 %v390, 0.0
  %v498 = vmax.f32 %v392, 0.0
  %v499 = vmax.f32 %v479, 0.0
  %v500 = vmax.f32 %v481, 0.0
  %v501 = vmax.f32 %v396, 0.0
  %v502 = vmax.f32 %v398, 0.0
  %v503 = vmax.f32 %v485, 0.0
  %v504 = vmax.f32 %v487, 0.0
  %v505 = vld [vmem:[%s4] sm:$0xff]
  %vm506 = vcmask 261120
  %v508 = vsel %vm506, %v505, 0
  %510 = vmatprep.subr.mxu0 0.0
  %511 = vmatpush1.msra.mxu0 0.0
  %512 = vmatprep.subr.mxu0 0.0
  %513 = vmatpush1.msra.mxu0 0.0
  %514 = vmatprep.subr.mxu0 0.0
  %515 = vmatpush1.msra.mxu0 0.0
  %516 = vmatprep.subr.mxu0 0.0
  %517 = vmatpush1.msra.mxu0 0.0
  %518 = vmatprep.subr.mxu0 0.0
  %519 = vmatpush1.msra.mxu0 0.0
  %520 = vmatprep.subr.mxu0 0.0
  %521 = vmatpush1.msra.mxu0 0.0
  %522 = vmatprep.subr.mxu0 0.0
  %523 = vmatpush1.msra.mxu0 0.0
  %524 = vmatprep.subr.mxu0 0.0
  %525 = vmatpush1.msra.mxu0 0.0
  %526 = vmatprep.subr.mxu0 0.0
  %527 = vmatpush1.msra.mxu0 0.0
  %528 = vmatprep.subr.mxu0 0.0
  %529 = vmatpush1.msra.mxu0 0.0
  %530 = vmatprep.subr.mxu0 0.0
  %531 = vmatpush1.msra.mxu0 0.0
  %532 = vmatprep.subr.mxu0 0.0
  %533 = vmatpush1.msra.mxu0 0.0
  %534 = vmatprep.subr.mxu0 %v502
  %535 = vmatpush1.msra.mxu0 %v501
  %536 = vmatprep.subr.mxu0 %v498
  %537 = vmatpush1.msra.mxu0 %v497
  %538 = vmatprep.subr.mxu0 %v494
  %539 = vmatpush1.msra.mxu0 %v493
  %540 = vmatprep.subr.mxu0 %v490
  %541 = vmatpush1.msra.mxu0 %v489
  %542 = vmatprep.subr.mxu0 0.0
  %543 = vmatpush2.msra.mxu0 0.0
  %544 = vmatprep.subr.mxu0 0.0
  %545 = vmatpush2.msra.mxu0 0.0
  %546 = vmatprep.subr.mxu0 0.0
  %547 = vmatpush2.msra.mxu0 0.0
  %548 = vmatprep.subr.mxu0 0.0
  %549 = vmatpush2.msra.mxu0 0.0
  %550 = vmatprep.subr.mxu0 0.0
  %551 = vmatpush2.msra.mxu0 0.0
  %552 = vmatprep.subr.mxu0 0.0
  %553 = vmatpush2.msra.mxu0 0.0
  %554 = vmatprep.subr.mxu0 0.0
  %555 = vmatpush2.msra.mxu0 0.0
  %556 = vmatprep.subr.mxu0 0.0
  %557 = vmatpush2.msra.mxu0 0.0
  %558 = vmatprep.subr.mxu0 0.0
  %559 = vmatpush2.msra.mxu0 0.0
  %560 = vmatprep.subr.mxu0 0.0
  %561 = vmatpush2.msra.mxu0 0.0
  %562 = vmatprep.subr.mxu0 0.0
  %563 = vmatpush2.msra.mxu0 0.0
  %564 = vmatprep.subr.mxu0 0.0
  %565 = vmatpush2.msra.mxu0 0.0
  %566 = vmatprep.subr.mxu0 0.0
  %567 = vmatpush2.msra.mxu0 0.0
  %568 = vmatprep.subr.mxu0 0.0
  %569 = vmatpush2.msra.mxu0 0.0
  %570 = vmatprep.subr.mxu0 0.0
  %571 = vmatpush2.msra.mxu0 0.0
  %572 = vmatprep.subr.mxu0 0.0
  %573 = vmatpush2.msra.mxu0 0.0
  %574 = vmatprep.mubr.f32.mxu0 0.0
  %575 = vmatmul.mubr.f32.gmra.mxu0 %v508
  %v576 = vpop.f32.mrf.mxu0
  %v577 = vadd.f32 0.0, %v576
  %v578 = vpop.f32.mrf.mxu0
  %v579 = vadd.f32 0.0, %v578
  %580 = vdwg.mxu0
  %581 = vmatprep.subr.mxu0 0.0
  %582 = vmatpush1.msra.mxu0 0.0
  %583 = vmatprep.subr.mxu0 0.0
  %584 = vmatpush1.msra.mxu0 0.0
  %585 = vmatprep.subr.mxu0 0.0
  %586 = vmatpush1.msra.mxu0 0.0
  %587 = vmatprep.subr.mxu0 0.0
  %588 = vmatpush1.msra.mxu0 0.0
  %589 = vmatprep.subr.mxu0 0.0
  %590 = vmatpush1.msra.mxu0 0.0
  %591 = vmatprep.subr.mxu0 0.0
  %592 = vmatpush1.msra.mxu0 0.0
  %593 = vmatprep.subr.mxu0 0.0
  %594 = vmatpush1.msra.mxu0 0.0
  %595 = vmatprep.subr.mxu0 0.0
  %596 = vmatpush1.msra.mxu0 0.0
  %597 = vmatprep.subr.mxu0 0.0
  %598 = vmatpush1.msra.mxu0 0.0
  %599 = vmatprep.subr.mxu0 0.0
  %600 = vmatpush1.msra.mxu0 0.0
  %601 = vmatprep.subr.mxu0 0.0
  %602 = vmatpush1.msra.mxu0 0.0
  %603 = vmatprep.subr.mxu0 0.0
  %604 = vmatpush1.msra.mxu0 0.0
  %605 = vmatprep.subr.mxu0 %v504
  %606 = vmatpush1.msra.mxu0 %v503
  %607 = vmatprep.subr.mxu0 %v500
  %608 = vmatpush1.msra.mxu0 %v499
  %609 = vmatprep.subr.mxu0 %v496
  %610 = vmatpush1.msra.mxu0 %v495
  %611 = vmatprep.subr.mxu0 %v492
  %612 = vmatpush1.msra.mxu0 %v491
  %613 = vmatprep.subr.mxu0 0.0
  %614 = vmatpush2.msra.mxu0 0.0
  %615 = vmatprep.subr.mxu0 0.0
  %616 = vmatpush2.msra.mxu0 0.0
  %617 = vmatprep.subr.mxu0 0.0
  %618 = vmatpush2.msra.mxu0 0.0
  %619 = vmatprep.subr.mxu0 0.0
  %620 = vmatpush2.msra.mxu0 0.0
  %621 = vmatprep.subr.mxu0 0.0
  %622 = vmatpush2.msra.mxu0 0.0
  %623 = vmatprep.subr.mxu0 0.0
  %624 = vmatpush2.msra.mxu0 0.0
  %625 = vmatprep.subr.mxu0 0.0
  %626 = vmatpush2.msra.mxu0 0.0
  %627 = vmatprep.subr.mxu0 0.0
  %628 = vmatpush2.msra.mxu0 0.0
  %629 = vmatprep.subr.mxu0 0.0
  %630 = vmatpush2.msra.mxu0 0.0
  %631 = vmatprep.subr.mxu0 0.0
  %632 = vmatpush2.msra.mxu0 0.0
  %633 = vmatprep.subr.mxu0 0.0
  %634 = vmatpush2.msra.mxu0 0.0
  %635 = vmatprep.subr.mxu0 0.0
  %636 = vmatpush2.msra.mxu0 0.0
  %637 = vmatprep.subr.mxu0 0.0
  %638 = vmatpush2.msra.mxu0 0.0
  %639 = vmatprep.subr.mxu0 0.0
  %640 = vmatpush2.msra.mxu0 0.0
  %641 = vmatprep.subr.mxu0 0.0
  %642 = vmatpush2.msra.mxu0 0.0
  %643 = vmatprep.subr.mxu0 0.0
  %644 = vmatpush2.msra.mxu0 0.0
  %645 = vmatprep.mubr.f32.mxu0 0.0
  %646 = vmatmul.mubr.f32.gmra.mxu0 %v508
  %v647 = vpop.f32.mrf.mxu0
  %v648 = vadd.f32 0.0, %v647
  %v649 = vpop.f32.mrf.mxu0
  %v650 = vadd.f32 0.0, %v649
  %651 = vdwg.mxu0
  %v652 = vld [vmem:[%s5] sm:$0xff]
  %v653 = vld [vmem:[%s5 + $0x8] sm:$0xff]
  %v654 = vld [vmem:[%s5 + $0x10] sm:$0xff]
  %v655 = vld [vmem:[%s5 + $0x18] sm:$0xff]
  %v656 = vld [vmem:[%s5 + $0x20] sm:$0xff]
  %v657 = vld [vmem:[%s5 + $0x28] sm:$0xff]
  %v658 = vld [vmem:[%s5 + $0x30] sm:$0xff]
  %v659 = vld [vmem:[%s5 + $0x38] sm:$0xff]
  %v660 = vld [vmem:[%s5 + $0x40] sm:$0xff]
  %v661 = vld [vmem:[%s5 + $0x48] sm:$0xff]
  %v662 = vld [vmem:[%s5 + $0x50] sm:$0xff]
  %v663 = vld [vmem:[%s5 + $0x58] sm:$0xff]
  %v664 = vld [vmem:[%s5 + $0x60] sm:$0xff]
  %v665 = vld [vmem:[%s5 + $0x68] sm:$0xff]
  %v666 = vld [vmem:[%s5 + $0x70] sm:$0xff]
  %v667 = vld [vmem:[%s5 + $0x78] sm:$0xff]
  %v668 = vld [vmem:[%s5 + $0x80] sm:$0xff]
  %v669 = vld [vmem:[%s5 + $0x88] sm:$0xff]
  %v670 = vld [vmem:[%s5 + $0x90] sm:$0xff]
  %v671 = vld [vmem:[%s5 + $0x98] sm:$0xff]
  %v672 = vld [vmem:[%s5 + $0xa0] sm:$0xff]
  %v673 = vld [vmem:[%s5 + $0xa8] sm:$0xff]
  %v674 = vld [vmem:[%s5 + $0xb0] sm:$0xff]
  %v675 = vld [vmem:[%s5 + $0xb8] sm:$0xff]
  %v676 = vld [vmem:[%s5 + $0xc0] sm:$0xff]
  %v677 = vld [vmem:[%s5 + $0xc8] sm:$0xff]
  %v678 = vld [vmem:[%s5 + $0xd0] sm:$0xff]
  %v679 = vld [vmem:[%s5 + $0xd8] sm:$0xff]
  %v680 = vld [vmem:[%s5 + $0xe0] sm:$0xff]
  %v681 = vld [vmem:[%s5 + $0xe8] sm:$0xff]
  %v682 = vld [vmem:[%s5 + $0xf0] sm:$0xff]
  %v683 = vld [vmem:[%s5 + $0xf8] sm:$0xff]
  %v684 = vld [vmem:[%s5 + $0x100] sm:$0xff]
  %v685 = vld [vmem:[%s5 + $0x108] sm:$0xff]
  %v686 = vld [vmem:[%s5 + $0x110] sm:$0xff]
  %v687 = vld [vmem:[%s5 + $0x118] sm:$0xff]
  %v688 = vld [vmem:[%s5 + $0x120] sm:$0xff]
  %v689 = vld [vmem:[%s5 + $0x128] sm:$0xff]
  %v690 = vld [vmem:[%s5 + $0x130] sm:$0xff]
  %v691 = vld [vmem:[%s5 + $0x138] sm:$0xff]
  %v692 = vld [vmem:[%s5 + $0x140] sm:$0xff]
  %v693 = vld [vmem:[%s5 + $0x148] sm:$0xff]
  %v694 = vld [vmem:[%s5 + $0x150] sm:$0xff]
  %v695 = vld [vmem:[%s5 + $0x158] sm:$0xff]
  %v696 = vld [vmem:[%s5 + $0x160] sm:$0xff]
  %v697 = vld [vmem:[%s5 + $0x168] sm:$0xff]
  %v698 = vld [vmem:[%s5 + $0x170] sm:$0xff]
  %v699 = vld [vmem:[%s5 + $0x178] sm:$0xff]
  %v700 = vld [vmem:[%s5 + $0x180] sm:$0xff]
  %v701 = vld [vmem:[%s5 + $0x188] sm:$0xff]
  %v702 = vld [vmem:[%s5 + $0x190] sm:$0xff]
  %v703 = vld [vmem:[%s5 + $0x198] sm:$0xff]
  %v704 = vld [vmem:[%s5 + $0x1a0] sm:$0xff]
  %v705 = vld [vmem:[%s5 + $0x1a8] sm:$0xff]
  %v706 = vld [vmem:[%s5 + $0x1b0] sm:$0xff]
  %v707 = vld [vmem:[%s5 + $0x1b8] sm:$0xff]
  %v708 = vld [vmem:[%s5 + $0x1c0] sm:$0xff]
  %v709 = vld [vmem:[%s5 + $0x1c8] sm:$0xff]
  %v710 = vld [vmem:[%s5 + $0x1d0] sm:$0xff]
  %v711 = vld [vmem:[%s5 + $0x1d8] sm:$0xff]
  %v712 = vld [vmem:[%s5 + $0x1e0] sm:$0xff]
  %v713 = vld [vmem:[%s5 + $0x1e8] sm:$0xff]
  %v714 = vld [vmem:[%s5 + $0x1f0] sm:$0xff]
  %v715 = vld [vmem:[%s5 + $0x1f8] sm:$0xff]
  %s716 = sld [smem:[#allocation2]]
  %v717 = vstv %s716
  %718 = vmatprep.subr.mxu0 0.0
  %719 = vmatpush1.msra.mxu0 %v667
  %720 = vmatprep.subr.mxu0 0.0
  %721 = vmatpush1.msra.mxu0 %v666
  %722 = vmatprep.subr.mxu0 0.0
  %723 = vmatpush1.msra.mxu0 %v665
  %724 = vmatprep.subr.mxu0 0.0
  %725 = vmatpush1.msra.mxu0 %v664
  %726 = vmatprep.subr.mxu0 0.0
  %727 = vmatpush1.msra.mxu0 %v663
  %728 = vmatprep.subr.mxu0 0.0
  %729 = vmatpush1.msra.mxu0 %v662
  %730 = vmatprep.subr.mxu0 0.0
  %731 = vmatpush1.msra.mxu0 %v661
  %732 = vmatprep.subr.mxu0 0.0
  %733 = vmatpush1.msra.mxu0 %v660
  %734 = vmatprep.subr.mxu0 0.0
  %735 = vmatpush1.msra.mxu0 %v659
  %736 = vmatprep.subr.mxu0 0.0
  %737 = vmatpush1.msra.mxu0 %v658
  %738 = vmatprep.subr.mxu0 0.0
  %739 = vmatpush1.msra.mxu0 %v657
  %740 = vmatprep.subr.mxu0 0.0
  %741 = vmatpush1.msra.mxu0 %v656
  %742 = vmatprep.subr.mxu0 0.0
  %743 = vmatpush1.msra.mxu0 %v655
  %744 = vmatprep.subr.mxu0 0.0
  %745 = vmatpush1.msra.mxu0 %v654
  %746 = vmatprep.subr.mxu0 0.0
  %747 = vmatpush1.msra.mxu0 %v653
  %748 = vmatprep.subr.mxu0 0.0
  %749 = vmatpush1.msra.mxu0 %v652
  %750 = vmatprep.subr.mxu0 0.0
  %751 = vmatpush2.msra.mxu0 %v683
  %752 = vmatprep.subr.mxu0 0.0
  %753 = vmatpush2.msra.mxu0 %v682
  %754 = vmatprep.subr.mxu0 0.0
  %755 = vmatpush2.msra.mxu0 %v681
  %756 = vmatprep.subr.mxu0 0.0
  %757 = vmatpush2.msra.mxu0 %v680
  %758 = vmatprep.subr.mxu0 0.0
  %759 = vmatpush2.msra.mxu0 %v679
  %760 = vmatprep.subr.mxu0 0.0
  %761 = vmatpush2.msra.mxu0 %v678
  %762 = vmatprep.subr.mxu0 0.0
  %763 = vmatpush2.msra.mxu0 %v677
  %764 = vmatprep.subr.mxu0 0.0
  %765 = vmatpush2.msra.mxu0 %v676
  %766 = vmatprep.subr.mxu0 0.0
  %767 = vmatpush2.msra.mxu0 %v675
  %768 = vmatprep.subr.mxu0 0.0
  %769 = vmatpush2.msra.mxu0 %v674
  %770 = vmatprep.subr.mxu0 0.0
  %771 = vmatpush2.msra.mxu0 %v673
  %772 = vmatprep.subr.mxu0 0.0
  %773 = vmatpush2.msra.mxu0 %v672
  %774 = vmatprep.subr.mxu0 0.0
  %775 = vmatpush2.msra.mxu0 %v671
  %776 = vmatprep.subr.mxu0 0.0
  %777 = vmatpush2.msra.mxu0 %v670
  %778 = vmatprep.subr.mxu0 0.0
  %779 = vmatpush2.msra.mxu0 %v669
  %780 = vmatprep.subr.mxu0 0.0
  %781 = vmatpush2.msra.mxu0 %v668
  %782 = vmatprep.mubr.f32.mxu0 %v579
  %783 = vmatmul.mubr.f32.gmra.mxu0 %v577
  %v784 = vpop.f32.mrf.mxu0
  %v785 = vadd.f32 %v717, %v784
  %v786 = vpop.f32.mrf.mxu0
  %787 = vdwg.mxu0
  %788 = vmatprep.subr.mxu0 0.0
  %789 = vmatpush1.msra.mxu0 %v699
  %790 = vmatprep.subr.mxu0 0.0
  %791 = vmatpush1.msra.mxu0 %v698
  %792 = vmatprep.subr.mxu0 0.0
  %793 = vmatpush1.msra.mxu0 %v697
  %794 = vmatprep.subr.mxu0 0.0
  %795 = vmatpush1.msra.mxu0 %v696
  %796 = vmatprep.subr.mxu0 0.0
  %797 = vmatpush1.msra.mxu0 %v695
  %798 = vmatprep.subr.mxu0 0.0
  %799 = vmatpush1.msra.mxu0 %v694
  %800 = vmatprep.subr.mxu0 0.0
  %801 = vmatpush1.msra.mxu0 %v693
  %802 = vmatprep.subr.mxu0 0.0
  %803 = vmatpush1.msra.mxu0 %v692
  %804 = vmatprep.subr.mxu0 0.0
  %805 = vmatpush1.msra.mxu0 %v691
  %806 = vmatprep.subr.mxu0 0.0
  %807 = vmatpush1.msra.mxu0 %v690
  %808 = vmatprep.subr.mxu0 0.0
  %809 = vmatpush1.msra.mxu0 %v689
  %810 = vmatprep.subr.mxu0 0.0
  %811 = vmatpush1.msra.mxu0 %v688
  %812 = vmatprep.subr.mxu0 0.0
  %813 = vmatpush1.msra.mxu0 %v687
  %814 = vmatprep.subr.mxu0 0.0
  %815 = vmatpush1.msra.mxu0 %v686
  %816 = vmatprep.subr.mxu0 0.0
  %817 = vmatpush1.msra.mxu0 %v685
  %818 = vmatprep.subr.mxu0 0.0
  %819 = vmatpush1.msra.mxu0 %v684
  %820 = vmatprep.subr.mxu0 0.0
  %821 = vmatpush2.msra.mxu0 %v715
  %822 = vmatprep.subr.mxu0 0.0
  %823 = vmatpush2.msra.mxu0 %v714
  %824 = vmatprep.subr.mxu0 0.0
  %825 = vmatpush2.msra.mxu0 %v713
  %826 = vmatprep.subr.mxu0 0.0
  %827 = vmatpush2.msra.mxu0 %v712
  %828 = vmatprep.subr.mxu0 0.0
  %829 = vmatpush2.msra.mxu0 %v711
  %830 = vmatprep.subr.mxu0 0.0
  %831 = vmatpush2.msra.mxu0 %v710
  %832 = vmatprep.subr.mxu0 0.0
  %833 = vmatpush2.msra.mxu0 %v709
  %834 = vmatprep.subr.mxu0 0.0
  %835 = vmatpush2.msra.mxu0 %v708
  %836 = vmatprep.subr.mxu0 0.0
  %837 = vmatpush2.msra.mxu0 %v707
  %838 = vmatprep.subr.mxu0 0.0
  %839 = vmatpush2.msra.mxu0 %v706
  %840 = vmatprep.subr.mxu0 0.0
  %841 = vmatpush2.msra.mxu0 %v705
  %842 = vmatprep.subr.mxu0 0.0
  %843 = vmatpush2.msra.mxu0 %v704
  %844 = vmatprep.subr.mxu0 0.0
  %845 = vmatpush2.msra.mxu0 %v703
  %846 = vmatprep.subr.mxu0 0.0
  %847 = vmatpush2.msra.mxu0 %v702
  %848 = vmatprep.subr.mxu0 0.0
  %849 = vmatpush2.msra.mxu0 %v701
  %850 = vmatprep.subr.mxu0 0.0
  %851 = vmatpush2.msra.mxu0 %v700
  %852 = vmatprep.mubr.f32.mxu0 %v650
  %853 = vmatmul.mubr.f32.gmra.mxu0 %v648
  %v854 = vpop.f32.mrf.mxu0
  %v855 = vadd.f32 %v785, %v854
  %v856 = vpop.f32.mrf.mxu0
  %857 = vdwg.mxu0
  %858 = vst [vmem:[%s7] sm:$0xff] %v855
  // Predicated region
  $region30: #{g2net_forward.1} parent=0 // pred_check
    _
  $region31: #{g2net_forward.1} parent=0 // pred_check_branch
    %860 = sbr.rel (0) target = $region33
  $region32: #{g2net_forward.1} parent=0 // pred_region
    _
  $region33: #{g2net_forward.1} parent=0 // pred_fallthru
    _
  // Predicated region
  $region34: #{g2net_forward.1} parent=0 // pred_check
    _
  $region35: #{g2net_forward.1} parent=0 // pred_check_branch
    %862 = sbr.rel (0) target = $region37
  $region36: #{g2net_forward.1} parent=0 // pred_region
    _
  $region37: #{g2net_forward.1} parent=0 // pred_fallthru
    _

</llo_original>
